<compile_context>
chip_gen: v6e
topology: v6e:2x2x1
jax: 0.10.0
libtpu: 0.0.40
codegen_flags: <defaults>
</compile_context>

<pallas_src>
import jax
import jax.numpy as jnp
from jax.experimental import pallas as pl
from jax.experimental.pallas import tpu as pltpu


def attention_fact_kernel(hidden_ref, querys_ref, out_ref, m_sc, l_sc, acc_sc):
    s_idx = pl.program_id(1)

    @pl.when(s_idx == 0)
    def _init():
        m_sc[...] = jnp.full_like(m_sc, -jnp.inf)
        l_sc[...] = jnp.zeros_like(l_sc)
        acc_sc[...] = jnp.zeros_like(acc_sc)

    h = hidden_ref[...]                        # (tS, H), input dtype (no up-cast)
    q = querys_ref[...]                        # (C, H),  input dtype

    # scores[c, s] = <querys[c], hidden[s]>  == `factor` in [C, S] layout for this batch.
    # Single 2-D MXU matmul, contraction over H, no transpose/relayout of the big tile.
    scores = jnp.einsum('ch,sh->cs', q, h,
                        preferred_element_type=jnp.float32)          # (C, tS), f32

    # Online softmax over the sequence axis (lane axis -> cheap reductions).
    m_prev = m_sc[...]                                               # (C, 1)
    m_new = jnp.maximum(m_prev, jnp.max(scores, axis=-1, keepdims=True))
    alpha = jnp.exp(m_prev - m_new)                                  # (C, 1)
    p = jnp.exp(scores - m_new)                                      # (C, tS), f32
    l_sc[...] = alpha * l_sc[...] + jnp.sum(p, axis=-1, keepdims=True)
    m_sc[...] = m_new

    # acc[c, :] (+)= sum_s p[c, s] * hidden[s, :]
    # Down-cast the small attn matrix to hidden's dtype instead of up-casting hidden.
    pv = jnp.einsum('cs,sh->ch', p.astype(h.dtype), h,
                    preferred_element_type=jnp.float32)              # (C, H), f32
    acc_sc[...] = alpha * acc_sc[...] + pv

    @pl.when(s_idx == pl.num_programs(1) - 1)
    def _finalize():
        # Exact f32 normalization (approx reciprocal was outside the ref tolerance).
        out_ref[...] = (acc_sc[...] / l_sc[...]).astype(out_ref.dtype)


def _pick_seq_tile(seq_len, target):
    """Largest divisor of seq_len <= target that is a multiple of 8 (sublane-clean);
    fall back to the full sequence (block == full dim is always legal)."""
    upper = max(1, min(seq_len, int(target)))
    for d in range(upper, 0, -1):
        if seq_len % d == 0 and d % 8 == 0:
            return d
    return seq_len


def attention_fact(hidden, querys, *, block_s=None, hidden_tile_bytes=8 << 20):
    """hidden: [B, S, H], querys: [C, H] -> [B, C*H]"""
    B, S, H = hidden.shape
    C, Hq = querys.shape
    assert H == Hq

    itemsize = jnp.dtype(hidden.dtype).itemsize
    q_itemsize = jnp.dtype(querys.dtype).itemsize

    if block_s is None:
        # ~8 MiB of streamed hidden per grid step, but cap so the f32 scores/p
        # temporaries (2 * C * tS * 4 bytes) stay ~<= 8 MiB, and never exceed 2048.
        bytes_target = max(8, hidden_tile_bytes // max(H * itemsize, 1))
        score_target = max(128, (1 << 20) // max(C, 1))
        block_s = _pick_seq_tile(S, min(bytes_target, score_target, 2048))
    assert S % block_s == 0

    # One batch per grid step (no per-step query broadcast / batched mini-matmuls);
    # with B >= 2 both v7x TensorCores get work on the "parallel" axis.
    grid = (B, S // block_s)

    # VMEM budget: double-buffered ins/outs (tile-padded), f32 accumulators, and the
    # f32 scores/p temporaries (Mosaic internal scratch / spill space), with headroom.
    pad = lambda x, m: ((x + m - 1) // m) * m
    hid_tile = pad(block_s, 8) * pad(H, 128) * itemsize
    q_tile = pad(C, 8) * pad(H, 128) * q_itemsize
    out_tile = pad(C, 8) * pad(H, 128) * itemsize
    acc_scratch = pad(C, 8) * (128 + 128 + pad(H, 128)) * 4          # m, l, acc (f32)
    score_tmp = 2 * pad(C, 8) * pad(block_s, 128) * 4                # scores + p (f32)
    budget = 2 * (2 * hid_tile + 2 * q_tile + 2 * out_tile) + acc_scratch + 2 * score_tmp
    try:
        # ~3/4 of physical VMEM: ~48 MiB on v7x (64 MiB), ~96 MiB on v5e/v6e (128 MiB).
        cap = int(pltpu.get_tpu_info().vmem_capacity_bytes) * 3 // 4
    except Exception:
        cap = 48 << 20
    vmem_limit = int(min(max(budget, 16 << 20), cap))

    out = pl.pallas_call(
        attention_fact_kernel,
        out_shape=jax.ShapeDtypeStruct((B, C, H), hidden.dtype),
        grid_spec=pltpu.PrefetchScalarGridSpec(
            num_scalar_prefetch=0,
            grid=grid,
            in_specs=[
                # hidden: one batch, tS sequence rows per step (the big DMA stream);
                # leading batch dim squeezed out of the kernel ref.
                pl.BlockSpec((None, block_s, H), lambda b, s: (b, s, 0)),
                # querys: small, shared across every grid step
                pl.BlockSpec((C, H), lambda b, s: (0, 0)),
            ],
            # output block is constant along the S axis -> resident accumulator target
            out_specs=pl.BlockSpec((None, C, H), lambda b, s: (b, 0, 0)),
            scratch_shapes=[
                pltpu.VMEM((C, 1), jnp.float32),   # running max   m
                pltpu.VMEM((C, 1), jnp.float32),   # running denom l
                pltpu.VMEM((C, H), jnp.float32),   # un-normalized result
            ],
        ),
        compiler_params=pltpu.CompilerParams(
            dimension_semantics=("parallel", "arbitrary"),
            vmem_limit_bytes=vmem_limit,
        ),
    )(hidden, querys)

    # glue: .view(-1, channel_num * hidden_size) — free contiguous reshape in XLA.
    # (Output volume is negligible vs. the streamed hidden tensor, so an in-kernel
    # lane-dense (B, C*H) store is not worth the relayout risk here.)
    return out.reshape(B, C * H)


def attention_fact_ref(hidden, querys):
    # pure-JAX reference mirroring the PyTorch module
    factor = jnp.matmul(hidden, querys.T)          # [B, S, C]
    factor = jnp.transpose(factor, (0, 2, 1))      # [B, C, S]
    factor = jax.nn.softmax(factor, axis=2)
    result = jnp.matmul(factor, hidden)            # [B, C, H]
    return result.reshape(result.shape[0], -1)     # [B, C*H]


if __name__ == "__main__":
    B, S, H, C = 2, 8, 32, 4   # batch, seq_len, hidden_size, channel_num

    key = jax.random.PRNGKey(0)
    k_h, k_q, k_h2 = jax.random.split(key, 3)
    hidden = jax.random.normal(k_h, (B, S, H), dtype=jnp.float32)
    # the module has no learned params; querys is a forward input, built deterministically
    querys = jax.random.normal(k_q, (C, H), dtype=jnp.float32)

    out = attention_fact(hidden, querys)
    out = jax.block_until_ready(out)

    ref = attention_fact_ref(hidden, querys)
    assert out.shape == (B, C * H), out.shape
    assert jnp.allclose(out, ref, atol=2e-3, rtol=2e-3), float(jnp.max(jnp.abs(out - ref)))

    # also exercise the multi-step online-softmax path (grid = (2, 4)) at small shapes
    hidden2 = jax.random.normal(k_h2, (2, 32, H), dtype=jnp.float32)
    out2 = jax.block_until_ready(attention_fact(hidden2, querys, block_s=8))
    ref2 = attention_fact_ref(hidden2, querys)
    assert jnp.allclose(out2, ref2, atol=2e-3, rtol=2e-3), float(jnp.max(jnp.abs(out2 - ref2)))

    print("KERNEL_OK")
</pallas_src>

<mosaic_0001>
module attributes {stable_mosaic.version = 11 : i64} {
  func.func @attention_fact_kernel(%arg0: i32, %arg1: i32, %arg2: memref<1x8x32xf32, #tpu.memory_space<vmem>>, %arg3: memref<4x32xf32, #tpu.memory_space<vmem>>, %arg4: memref<1x4x32xf32, #tpu.memory_space<vmem>>, %arg5: memref<4x1xf32, #tpu.memory_space<vmem>>, %arg6: memref<4x1xf32, #tpu.memory_space<vmem>>, %arg7: memref<4x32xf32, #tpu.memory_space<vmem>>) attributes {dimension_semantics = [#tpu.dimension_semantics<parallel>, #tpu.dimension_semantics<arbitrary>], iteration_bounds = array<i64: 2, 1>, scalar_prefetch = 0 : i64, scratch_operands = 3 : i64, tpu.core_type = #tpu.core_type<tc>, window_params = [{transform_indices = @transform_0, window_bounds = array<i64: 1, 8, 32>}, {pipeline_mode = #tpu.pipeline_mode<synchronous>, transform_indices = @transform_1, window_bounds = array<i64: 4, 32>}, {transform_indices = @transform_2, window_bounds = array<i64: 1, 4, 32>}]} {
    %c0_i32 = arith.constant 0 : i32
    %0 = arith.cmpi eq, %arg1, %c0_i32 : i32
    %1 = arith.extui %0 : i1 to i32
    %c0_i32_0 = arith.constant 0 : i32
    %2 = arith.cmpi ne, %1, %c0_i32_0 : i32
    scf.if %2 {
      %cst_22 = arith.constant 0xFF800000 : f32
      %32 = vector.broadcast %cst_22 : f32 to vector<4x1xf32>
      %c0_23 = arith.constant 0 : index
      %c0_24 = arith.constant 0 : index
      %33 = vector.load %arg5[%c0_23, %c0_24] : memref<4x1xf32, #tpu.memory_space<vmem>>, vector<4x1xf32>
      tpu.vector_store %arg5[%c0_23, %c0_24], %32 {strides = array<i32>} : memref<4x1xf32, #tpu.memory_space<vmem>>, vector<4x1xf32>,
      %cst_25 = arith.constant 0.000000e+00 : f32
      %34 = vector.broadcast %cst_25 : f32 to vector<4x1xf32>
      %c0_26 = arith.constant 0 : index
      %c0_27 = arith.constant 0 : index
      %35 = vector.load %arg6[%c0_26, %c0_27] : memref<4x1xf32, #tpu.memory_space<vmem>>, vector<4x1xf32>
      tpu.vector_store %arg6[%c0_26, %c0_27], %34 {strides = array<i32>} : memref<4x1xf32, #tpu.memory_space<vmem>>, vector<4x1xf32>,
      %cst_28 = arith.constant 0.000000e+00 : f32
      %36 = vector.broadcast %cst_28 : f32 to vector<4x32xf32>
      %c0_29 = arith.constant 0 : index
      %c0_30 = arith.constant 0 : index
      %37 = vector.load %arg7[%c0_29, %c0_30] : memref<4x32xf32, #tpu.memory_space<vmem>>, vector<4x32xf32>
      tpu.vector_store %arg7[%c0_29, %c0_30], %36 {strides = array<i32>} : memref<4x32xf32, #tpu.memory_space<vmem>>, vector<4x32xf32>,
    } else {
    }
    %c0 = arith.constant 0 : index
    %c0_1 = arith.constant 0 : index
    %c0_2 = arith.constant 0 : index
    %3 = vector.load %arg2[%c0, %c0_1, %c0_2] : memref<1x8x32xf32, #tpu.memory_space<vmem>>, vector<1x8x32xf32>
    %4 = vector.shape_cast %3 : vector<1x8x32xf32> to vector<8x32xf32>
    %c0_3 = arith.constant 0 : index
    %c0_4 = arith.constant 0 : index
    %5 = vector.load %arg3[%c0_3, %c0_4] : memref<4x32xf32, #tpu.memory_space<vmem>>, vector<4x32xf32>
    "tpu.trace_start"() <{level = 10 : i32, message = "ch,sh->cs"}> : () -> ()
    %cst = arith.constant dense<0.000000e+00> : vector<4x8xf32>
    %6 = tpu.matmul %5, %4, %cst {dimension_numbers = #tpu.dot_dimension_numbers<[1], [1], [0], [0], [0, 0, 1, 0], [], []>} : vector<4x32xf32>, vector<8x32xf32>, vector<4x8xf32> -> vector<4x8xf32>
    "tpu.trace_stop"() : () -> ()
    %c0_5 = arith.constant 0 : index
    %c0_6 = arith.constant 0 : index
    %7 = vector.load %arg5[%c0_5, %c0_6] : memref<4x1xf32, #tpu.memory_space<vmem>>, vector<4x1xf32>
    %cst_7 = arith.constant dense<0xFF800000> : vector<4xf32>
    %8 = vector.multi_reduction <maximumf>, %6, %cst_7 [1] : vector<4x8xf32> to vector<4xf32>
    %9 = vector.shape_cast %8 : vector<4xf32> to vector<4x1xf32>
    %10 = arith.maximumf %7, %9 : vector<4x1xf32>
    %11 = arith.subf %7, %10 : vector<4x1xf32>
    %12 = math.exp %11 : vector<4x1xf32>
    %13 = vector.broadcast %10 : vector<4x1xf32> to vector<4x8xf32>
    %14 = arith.subf %6, %13 : vector<4x8xf32>
    %15 = math.exp %14 : vector<4x8xf32>
    %c0_8 = arith.constant 0 : index
    %c0_9 = arith.constant 0 : index
    %16 = vector.load %arg6[%c0_8, %c0_9] : memref<4x1xf32, #tpu.memory_space<vmem>>, vector<4x1xf32>
    %17 = arith.mulf %12, %16 : vector<4x1xf32>
    %cst_10 = arith.constant dense<0.000000e+00> : vector<4xf32>
    %18 = vector.multi_reduction <add>, %15, %cst_10 [1] : vector<4x8xf32> to vector<4xf32>
    %19 = vector.shape_cast %18 : vector<4xf32> to vector<4x1xf32>
    %20 = arith.addf %17, %19 : vector<4x1xf32>
    %c0_11 = arith.constant 0 : index
    %c0_12 = arith.constant 0 : index
    %21 = vector.load %arg6[%c0_11, %c0_12] : memref<4x1xf32, #tpu.memory_space<vmem>>, vector<4x1xf32>
    tpu.vector_store %arg6[%c0_11, %c0_12], %20 {strides = array<i32>} : memref<4x1xf32, #tpu.memory_space<vmem>>, vector<4x1xf32>,
    %c0_13 = arith.constant 0 : index
    %c0_14 = arith.constant 0 : index
    %22 = vector.load %arg5[%c0_13, %c0_14] : memref<4x1xf32, #tpu.memory_space<vmem>>, vector<4x1xf32>
    tpu.vector_store %arg5[%c0_13, %c0_14], %10 {strides = array<i32>} : memref<4x1xf32, #tpu.memory_space<vmem>>, vector<4x1xf32>,
    "tpu.trace_start"() <{level = 10 : i32, message = "cs,sh->ch"}> : () -> ()
    %cst_15 = arith.constant dense<0.000000e+00> : vector<4x32xf32>
    %23 = tpu.matmul %15, %4, %cst_15 {dimension_numbers = #tpu.dot_dimension_numbers<[1], [0], [0], [1], [0, 0, 1, 1], [], []>} : vector<4x8xf32>, vector<8x32xf32>, vector<4x32xf32> -> vector<4x32xf32>
    "tpu.trace_stop"() : () -> ()
    %c0_16 = arith.constant 0 : index
    %c0_17 = arith.constant 0 : index
    %24 = vector.load %arg7[%c0_16, %c0_17] : memref<4x32xf32, #tpu.memory_space<vmem>>, vector<4x32xf32>
    %25 = vector.broadcast %12 : vector<4x1xf32> to vector<4x32xf32>
    %26 = arith.mulf %25, %24 : vector<4x32xf32>
    %27 = arith.addf %26, %23 : vector<4x32xf32>
    %c0_18 = arith.constant 0 : index
    %c0_19 = arith.constant 0 : index
    %28 = vector.load %arg7[%c0_18, %c0_19] : memref<4x32xf32, #tpu.memory_space<vmem>>, vector<4x32xf32>
    tpu.vector_store %arg7[%c0_18, %c0_19], %27 {strides = array<i32>} : memref<4x32xf32, #tpu.memory_space<vmem>>, vector<4x32xf32>,
    %c0_i32_20 = arith.constant 0 : i32
    %29 = arith.cmpi eq, %arg1, %c0_i32_20 : i32
    %30 = arith.extui %29 : i1 to i32
    %c0_i32_21 = arith.constant 0 : i32
    %31 = arith.cmpi ne, %30, %c0_i32_21 : i32
    scf.if %31 {
      %c0_22 = arith.constant 0 : index
      %c0_23 = arith.constant 0 : index
      %32 = vector.load %arg7[%c0_22, %c0_23] : memref<4x32xf32, #tpu.memory_space<vmem>>, vector<4x32xf32>
      %c0_24 = arith.constant 0 : index
      %c0_25 = arith.constant 0 : index
      %33 = vector.load %arg6[%c0_24, %c0_25] : memref<4x1xf32, #tpu.memory_space<vmem>>, vector<4x1xf32>
      %34 = vector.broadcast %33 : vector<4x1xf32> to vector<4x32xf32>
      %35 = arith.divf %32, %34 : vector<4x32xf32>
      %c0_26 = arith.constant 0 : index
      %c0_27 = arith.constant 0 : index
      %c0_28 = arith.constant 0 : index
      %36 = vector.load %arg4[%c0_26, %c0_27, %c0_28] : memref<1x4x32xf32, #tpu.memory_space<vmem>>, vector<1x4x32xf32>
      %37 = vector.shape_cast %36 : vector<1x4x32xf32> to vector<4x32xf32>
      %38 = vector.shape_cast %35 : vector<4x32xf32> to vector<1x4x32xf32>
      tpu.vector_store %arg4[%c0_26, %c0_27, %c0_28], %38 {strides = array<i32>} : memref<1x4x32xf32, #tpu.memory_space<vmem>>, vector<1x4x32xf32>,
    } else {
    }
    return
  }
  func.func @transform_0(%arg0: i32, %arg1: i32) -> (i32, i32, i32) {
    %c0_i32 = arith.constant 0 : i32
    %c0_i32_0 = arith.constant 0 : i32
    return %arg0, %arg1, %c0_i32 : i32, i32, i32
  }
  func.func @transform_1(%arg0: i32, %arg1: i32) -> (i32, i32) {
    %c0_i32 = arith.constant 0 : i32
    %c0_i32_0 = arith.constant 0 : i32
    %c0_i32_1 = arith.constant 0 : i32
    return %c0_i32, %c0_i32_0 : i32, i32
  }
  func.func @transform_2(%arg0: i32, %arg1: i32) -> (i32, i32, i32) {
    %c0_i32 = arith.constant 0 : i32
    %c0_i32_0 = arith.constant 0 : i32
    %c0_i32_1 = arith.constant 0 : i32
    return %arg0, %c0_i32, %c0_i32_0 : i32, i32, i32
  }
}

</mosaic_0001>

<llo_original>
// kernel: tpu_custom_call.1
$region0: #{tpu_custom_call.1}
  #allocation0 [shape = 'u32[]', space=smem, size = 0x4, offset = 0x4, fixed_abs, tag = 'smem constant byte address 0x4 - core index']
  #allocation1 [shape = 'u32[144,128]{1,0:T(1,128)}', space=vmem, size = 0x12000, scoped, tag = 'internal scratch']
  #allocation2 [shape = 'f32[4,1]{1,0:T(4,128)}', space=vmem, size = 0x800, scoped, tag = 'scratch operand']
  #allocation3 [shape = 'f32[4,1]{1,0:T(4,128)}', space=vmem, size = 0x800, scoped, tag = 'scratch operand']
  #allocation4 [shape = 'f32[4,32]{1,0:T(4,128)}', space=vmem, size = 0x800, scoped, tag = 'scratch operand']
  %s0 = inlined_call_operand.hbm [shape: f32[2,8,32], index: 0, kind: input, shape index: {}]
  %s1 = inlined_call_operand.hbm [shape: f32[4,32], index: 1, kind: input, shape index: {}]
  %s2 = inlined_call_operand.hbm [shape: f32[2,4,32], index: 2, kind: output, shape index: {}]
  %s3 = sld [smem:[#allocation0]]
  $region57: #{tpu_custom_call.1} parent=0
    _
  %s5 = ssub.s32 1, %s3
  %s6 = scalar_select 0, %s5, %s3
  $region1: #{tpu_custom_call.1} parent=0
    #allocation5 [shape = 'u8[8192]{0}', space=vmem, size = 0x2000, scoped, tag = 'input window, operand 0']
    #allocation6 [shape = 's32[2]{0}', space=sflag, size = 0x8, scoped, tag = 'scoped memory for tpu_custom_call.1']
    #allocation7 [shape = 's32[2]{0}', space=sflag, size = 0x8, scoped, tag = 'scoped memory for tpu_custom_call.1']
    #allocation8 [shape = 'u8[2048]{0}', space=vmem, size = 0x800, scoped, tag = 'input window, operand 1, single buffered']
    #allocation9 [shape = 's32[1]{0}', space=sflag, size = 0x4, scoped, tag = 'scoped memory for tpu_custom_call.1']
    #allocation10 [shape = 'u8[4096]{0}', space=vmem, size = 0x1000, scoped, tag = 'output window, operand 0']
    %7 = vsyncpa [#allocation6], 0
    %s8 = scalar_lea.sflag [#allocation6], 1
    %9 = vsyncpa %s8, 0
    %10 = vsyncpa [#allocation9], 0
    %11 = vsyncpa [#allocation7], 0
    %s12 = scalar_lea.sflag [#allocation7], 1
    %13 = vsyncpa %s12, 0
    loop: start=0, step=1, limit=4
    $region2: #{tpu_custom_call.1} parent=1 // loop_pre_header
      _
    $region3: #{tpu_custom_call.1} parent=1 // loop_header
      %s15 = sphi 0, %s19
      %p16 = scmp.ge.s32.totalorder %s15, 4
      %s22 = sphi 0, %s34
      %s23 = sphi 0, %s30
      %s24 = sphi 0, %s22
      %s25 = sphi 0, %s23
      %s26 = sphi 0, %s24
      %s27 = sphi 0, %s25
      %s39 = sphi 0, %s41
      %s42 = sphi 0, %s39
      %s43 = sphi 0, %s42
      %s59 = sphi 0, %s43
      %s63 = sphi 0, %s63
      %s65 = sphi 0, %s63
      %s66 = sphi 0, %s65
      %s80 = sphi 0, %s66
      %s86 = sphi 0, %s88
      %s89 = sphi 0, %s86
      %s90 = sphi 0, %s89
      %s106 = sphi 0, %s90
    $region4: #{tpu_custom_call.1} parent=1 // loop_header_branch
      %18 = sbr.rel (%p16) target = $region8
    $region5: #{tpu_custom_call.1} parent=1 // loop_body
      %s20 = ssub.s32 %s15, 1
      %s21 = ssub.s32 %s15, 2
      %s28 = sadd.s32 1, %s23
      %p29 = scmp.ge.s32.totalorder %s28, 1
      %s30 = scalar_select %p29, 0, %s28
      %s31 = sadd.s32 1, %s22
      %s32 = scalar_select %p29, %s31, %s22
      %p33 = scmp.ge.s32.totalorder %s32, 2
      %s34 = scalar_select %p33, 0, %s32
      %s35 = ssub.s32 %s22, %s34
      %s36 = ssub.s32 %s23, %s30
      %s37 = sor.u32 %s35, %s36
      %p38 = scmp.eq.s32.totalorder %s37, 0
      %s40 = sadd.s32 %s39, 1
      %s41 = scalar_select %p38, %s39, %s40
      %p44 = pneg %p38
      %p45 = scmp.eq.s32.totalorder %s15, 1
      %p46 = por %p44, %p45
      %p47 = scmp.ne.s32.totalorder %s39, %s42
      %p48 = scmp.eq.s32.totalorder %s15, 0
      %p49 = por %p47, %p48
      %p50 = scmp.ne.s32.totalorder %s39, %s42
      %p51 = scmp.eq.s32.totalorder %s20, 1
      %p52 = por %p50, %p51
      %p53 = scmp.ne.s32.totalorder %s42, %s43
      %p54 = scmp.eq.s32.totalorder %s20, 0
      %p55 = por %p53, %p54
      %p56 = scmp.ne.s32.totalorder %s42, %s43
      %p57 = scmp.eq.s32.totalorder %s21, 1
      %p58 = por %p56, %p57
      %p60 = scmp.ne.s32.totalorder %s43, %s59
      %p61 = scmp.eq.s32.totalorder %s21, 0
      %p62 = por %p60, %p61
      %s64 = sadd.s32 %s63, 1
      %p67 = scmp.eq.s32.totalorder %s15, 1
      %p68 = scmp.ne.s32.totalorder %s63, %s65
      %p69 = scmp.eq.s32.totalorder %s15, 0
      %p70 = por %p68, %p69
      %p71 = scmp.ne.s32.totalorder %s63, %s65
      %p72 = scmp.eq.s32.totalorder %s20, 1
      %p73 = por %p71, %p72
      %p74 = scmp.ne.s32.totalorder %s65, %s66
      %p75 = scmp.eq.s32.totalorder %s20, 0
      %p76 = por %p74, %p75
      %p77 = scmp.ne.s32.totalorder %s65, %s66
      %p78 = scmp.eq.s32.totalorder %s21, 1
      %p79 = por %p77, %p78
      %p81 = scmp.ne.s32.totalorder %s66, %s80
      %p82 = scmp.eq.s32.totalorder %s21, 0
      %p83 = por %p81, %p82
      %s84 = ssub.s32 %s22, %s34
      %p85 = scmp.eq.s32.totalorder %s84, 0
      %s87 = sadd.s32 %s86, 1
      %s88 = scalar_select %p85, %s86, %s87
      %p91 = pneg %p85
      %p92 = scmp.eq.s32.totalorder %s15, 1
      %p93 = por %p91, %p92
      %p94 = scmp.ne.s32.totalorder %s86, %s89
      %p95 = scmp.eq.s32.totalorder %s15, 0
      %p96 = por %p94, %p95
      %p97 = scmp.ne.s32.totalorder %s86, %s89
      %p98 = scmp.eq.s32.totalorder %s20, 1
      %p99 = por %p97, %p98
      %p100 = scmp.ne.s32.totalorder %s89, %s90
      %p101 = scmp.eq.s32.totalorder %s20, 0
      %p102 = por %p100, %p101
      %p103 = scmp.ne.s32.totalorder %s89, %s90
      %p104 = scmp.eq.s32.totalorder %s21, 1
      %p105 = por %p103, %p104
      %p107 = scmp.ne.s32.totalorder %s90, %s106
      %p108 = scmp.eq.s32.totalorder %s21, 0
      %p109 = por %p107, %p108
      %p110 = scmp.le.s32.totalorder 1, %s15
      %p111 = scmp.lt.s32.totalorder %s15, 3
      %p112 = pnand %p110, %p111
      %p113 = pneg %p112
      // Predicated region
      $region9: #{tpu_custom_call.1} parent=5 // pred_check
        _
      $region10: #{tpu_custom_call.1} parent=5 // pred_check_branch
        %115 = sbr.rel (%p112) target = $region12
      $region11: #{tpu_custom_call.1} parent=5 // pred_region
        %s116 = ssub.s32 %s15, 1
        // Predicated region
        $region13: #{tpu_custom_call.1} parent=11 // pred_check
          %p117 = pneg %p76
        $region14: #{tpu_custom_call.1} parent=11 // pred_check_branch
          %119 = sbr.rel (%p117) target = $region16
        $region15: #{tpu_custom_call.1} parent=11 // pred_region
          %s121 = ssub.s32 64, 64
          %122 = vsyncadd [#allocation9], %s121
          %s124 = sshll.u32 [#allocation8], 4
          %s125 = int_to_ptr.vmem [resolvable:$true] %s124
          %127 = dma.hbm_to_vmem [thread:$0]  %s1, 64, %s125, [#allocation9]
        $region16: #{tpu_custom_call.1} parent=11 // pred_fallthru
          _
      $region12: #{tpu_custom_call.1} parent=5 // pred_fallthru
        _
      %p128 = scmp.lt.s32.totalorder %s15, 2
      // Predicated region
      $region17: #{tpu_custom_call.1} parent=5 // pred_check
        %p129 = pneg %p128
      $region18: #{tpu_custom_call.1} parent=5 // pred_check_branch
        %131 = sbr.rel (%p129) target = $region20
      $region19: #{tpu_custom_call.1} parent=5 // pred_region
        // Predicated region
        $region21: #{tpu_custom_call.1} parent=19 // pred_check
          %p132 = pneg %p49
        $region22: #{tpu_custom_call.1} parent=19 // pred_check_branch
          %134 = sbr.rel (%p132) target = $region24
        $region23: #{tpu_custom_call.1} parent=19 // pred_region
          %s135 = sand.u32 %s39, 1
          %s136 = scalar_lea.sflag [#allocation6], %s135
          %s137 = sand.u32 %s39, 1
          %s138 = smul.addr %s137, 8
          %s139 = scalar_lea.vmem [#allocation5], %s138
          %s141 = ssub.s32 128, 128
          %142 = vsyncadd %s136, %s141
          %s143 = sadd.s32 %s23, %s22
          %s144 = smul.addr %s143, 128
          %s145 = scalar_lea.hbm %s0, %s144
          %s147 = sshll.u32 %s139, 4
          %s148 = int_to_ptr.vmem [resolvable:$true] %s147
          %150 = dma.hbm_to_vmem [thread:$0]  %s145, 128, %s148, %s136
        $region24: #{tpu_custom_call.1} parent=19 // pred_fallthru
          _
      $region20: #{tpu_custom_call.1} parent=5 // pred_fallthru
        _
      %p151 = scmp.le.s32.totalorder 1, %s15
      %p152 = scmp.lt.s32.totalorder %s15, 3
      %p153 = pnand %p151, %p152
      %p154 = pneg %p153
      // Predicated region
      $region25: #{tpu_custom_call.1} parent=5 // pred_check
        _
      $region26: #{tpu_custom_call.1} parent=5 // pred_check_branch
        %156 = sbr.rel (%p153) target = $region28
      $region27: #{tpu_custom_call.1} parent=5 // pred_region
        %s157 = ssub.s32 %s15, 1
        %s158 = sand.u32 %s42, 1
        %s159 = scalar_lea.sflag [#allocation6], %s158
        %s160 = sand.u32 %s42, 1
        %s161 = smul.addr %s160, 8
        %s162 = scalar_lea.vmem [#allocation5], %s161
        // Predicated region
        $region29: #{tpu_custom_call.1} parent=27 // pred_check
          %p163 = pneg %p55
        $region30: #{tpu_custom_call.1} parent=27 // pred_check_branch
          %165 = sbr.rel (%p163) target = $region32
        $region31: #{tpu_custom_call.1} parent=27 // pred_region
          %166 = dma.done %s159, 128
        $region32: #{tpu_custom_call.1} parent=27 // pred_fallthru
          _
        // Predicated region
        $region33: #{tpu_custom_call.1} parent=27 // pred_check
          %p167 = pneg %p76
        $region34: #{tpu_custom_call.1} parent=27 // pred_check_branch
          %169 = sbr.rel (%p167) target = $region36
        $region35: #{tpu_custom_call.1} parent=27 // pred_region
          %170 = dma.done [#allocation9], 64
        $region36: #{tpu_custom_call.1} parent=27 // pred_fallthru
          _
        %s171 = sand.u32 %s42, 1
        %s172 = scalar_lea.sflag [#allocation6], %s171
        %s173 = sand.u32 %s42, 1
        %s174 = smul.addr %s173, 8
        %s175 = scalar_lea.vmem [#allocation5], %s174
        %p176 = pneg %p55
        %p177 = pneg %p52
        %p178 = pneg %p76
        %p179 = pneg %p73
        %p180 = pneg %p102
        %p181 = pneg %p99
        %s182 = sand.u32 %s89, 1
        %s183 = scalar_lea.sflag [#allocation7], %s182
        %s184 = sand.u32 %s89, 1
        %s185 = smul.addr %s184, 4
        %s186 = scalar_lea.vmem [#allocation10], %s185
        %p187 = scmp.eq.s32.totalorder %s25, 0
        // Predicated region
        $region37: #{tpu_custom_call.1} parent=27 // pred_check
          %p188 = pneg %p187
        $region38: #{tpu_custom_call.1} parent=27 // pred_check_branch
          %190 = sbr.rel (%p188) target = $region40
        $region39: #{tpu_custom_call.1} parent=27 // pred_region
          %vm191 = vcmask 3072
          %192 = vst.msk [vmem:[#allocation2] sm:$0xf] %vm191, -inf
          %193 = vst.msk [vmem:[#allocation3] sm:$0xf] %vm191, 0.0
          %vm194 = vcmask 257024
          %195 = vst.msk [vmem:[#allocation4] sm:$0xf] %vm194, 0.0
        $region40: #{tpu_custom_call.1} parent=27 // pred_fallthru
          _
        %v196 = vld [vmem:[%s162] sm:$0xff]
        %v197 = vld [vmem:[#allocation8] sm:$0xf]
        %vm198 = vcmask 261120
        %v200 = vsel %vm198, %v197, 0
        %v203 = vsel %vm198, %v196, 0
        %205 = vmatprep.subr.mxu0 0.0
        %206 = vmatpush1.xpose.msra.mxu0 0.0
        %207 = vmatprep.subr.mxu0 0.0
        %208 = vmatpush1.xpose.msra.mxu0 0.0
        %209 = vmatprep.subr.mxu0 0.0
        %210 = vmatpush1.xpose.msra.mxu0 0.0
        %211 = vmatprep.subr.mxu0 0.0
        %212 = vmatpush1.xpose.msra.mxu0 0.0
        %213 = vmatprep.subr.mxu0 0.0
        %214 = vmatpush1.xpose.msra.mxu0 0.0
        %215 = vmatprep.subr.mxu0 0.0
        %216 = vmatpush1.xpose.msra.mxu0 0.0
        %217 = vmatprep.subr.mxu0 0.0
        %218 = vmatpush1.xpose.msra.mxu0 0.0
        %219 = vmatprep.subr.mxu0 0.0
        %220 = vmatpush1.xpose.msra.mxu0 0.0
        %221 = vmatprep.subr.mxu0 0.0
        %222 = vmatpush1.xpose.msra.mxu0 0.0
        %223 = vmatprep.subr.mxu0 0.0
        %224 = vmatpush1.xpose.msra.mxu0 0.0
        %225 = vmatprep.subr.mxu0 0.0
        %226 = vmatpush1.xpose.msra.mxu0 0.0
        %227 = vmatprep.subr.mxu0 0.0
        %228 = vmatpush1.xpose.msra.mxu0 0.0
        %229 = vmatprep.subr.mxu0 0.0
        %230 = vmatpush1.xpose.msra.mxu0 0.0
        %231 = vmatprep.subr.mxu0 0.0
        %232 = vmatpush1.xpose.msra.mxu0 0.0
        %233 = vmatprep.subr.mxu0 0.0
        %234 = vmatpush1.xpose.msra.mxu0 0.0
        %235 = vmatprep.subr.mxu0 0.0
        %236 = vmatpush1.xpose.msra.mxu0 %v203
        %237 = vmatprep.subr.mxu0 0.0
        %238 = vmatpush2.xpose.msra.mxu0 0.0
        %239 = vmatprep.subr.mxu0 0.0
        %240 = vmatpush2.xpose.msra.mxu0 0.0
        %241 = vmatprep.subr.mxu0 0.0
        %242 = vmatpush2.xpose.msra.mxu0 0.0
        %243 = vmatprep.subr.mxu0 0.0
        %244 = vmatpush2.xpose.msra.mxu0 0.0
        %245 = vmatprep.subr.mxu0 0.0
        %246 = vmatpush2.xpose.msra.mxu0 0.0
        %247 = vmatprep.subr.mxu0 0.0
        %248 = vmatpush2.xpose.msra.mxu0 0.0
        %249 = vmatprep.subr.mxu0 0.0
        %250 = vmatpush2.xpose.msra.mxu0 0.0
        %251 = vmatprep.subr.mxu0 0.0
        %252 = vmatpush2.xpose.msra.mxu0 0.0
        %253 = vmatprep.subr.mxu0 0.0
        %254 = vmatpush2.xpose.msra.mxu0 0.0
        %255 = vmatprep.subr.mxu0 0.0
        %256 = vmatpush2.xpose.msra.mxu0 0.0
        %257 = vmatprep.subr.mxu0 0.0
        %258 = vmatpush2.xpose.msra.mxu0 0.0
        %259 = vmatprep.subr.mxu0 0.0
        %260 = vmatpush2.xpose.msra.mxu0 0.0
        %261 = vmatprep.subr.mxu0 0.0
        %262 = vmatpush2.xpose.msra.mxu0 0.0
        %263 = vmatprep.subr.mxu0 0.0
        %264 = vmatpush2.xpose.msra.mxu0 0.0
        %265 = vmatprep.subr.mxu0 0.0
        %266 = vmatpush2.xpose.msra.mxu0 0.0
        %267 = vmatprep.subr.mxu0 0.0
        %268 = vmatpush2.xpose.msra.mxu0 0.0
        %269 = vmatprep.mubr.f32.mxu0 0.0
        %270 = vmatmul.mubr.f32.gmra.mxu0 %v200
        %v271 = vpop.f32.mrf.mxu0
        %v272 = vadd.f32 0.0, %v271
        %v273 = vpop.f32.mrf.mxu0
        %274 = vdwg.mxu0
        %v275 = vld [vmem:[#allocation2] sm:$0xf]
        %vm276 = vcmask 60416
        %v277 = vsel %vm276, %v272, -inf
        %278 = vmax.xlane.f32.xlu0 %v277
        %v279 = vpop.xlane.xlu0 %278
        %v280 = vmax.f32 %v275, %v279
        %v281 = vsub.f32 %v275, %v280
        %v282 = vmul.f32 %v281, 1.442695
        %v283 = vpow.pop %v282
        %285 = vset.pattern.permute.xlu0 0
        %286 = vperm.xlu0 %285, %v280
        %v287 = vpop.permute.xlu0 %286
        %v289 = vsub.f32 %v272, %v287
        %v290 = vmul.f32 %v289, 1.442695
        %v291 = vpow.pop %v290
        %v292 = vld [vmem:[#allocation3] sm:$0xf]
        %v293 = vmul.f32 %v283, %v292
        %v294 = vsel %vm276, %v291, 0.0
        %295 = vadd.xlane.f32.xlu0 %v294
        %v296 = vpop.xlane.xlu0 %295
        %v297 = vadd.f32 %v293, %v296
        %vm298 = vcmask 3072
        %299 = vst.msk [vmem:[#allocation3] sm:$0xf] %vm298, %v297
        %300 = vst.msk [vmem:[#allocation2] sm:$0xf] %vm298, %v280
        %vm301 = vcmask 64512
        %v303 = vsel %vm301, %v291, 0
        %305 = vmatprep.subr.mxu0 0.0
        %306 = vmatpush1.msra.mxu0 0.0
        %307 = vmatprep.subr.mxu0 0.0
        %308 = vmatpush1.msra.mxu0 0.0
        %309 = vmatprep.subr.mxu0 0.0
        %310 = vmatpush1.msra.mxu0 0.0
        %311 = vmatprep.subr.mxu0 0.0
        %312 = vmatpush1.msra.mxu0 0.0
        %313 = vmatprep.subr.mxu0 0.0
        %314 = vmatpush1.msra.mxu0 0.0
        %315 = vmatprep.subr.mxu0 0.0
        %316 = vmatpush1.msra.mxu0 0.0
        %317 = vmatprep.subr.mxu0 0.0
        %318 = vmatpush1.msra.mxu0 0.0
        %319 = vmatprep.subr.mxu0 0.0
        %320 = vmatpush1.msra.mxu0 0.0
        %321 = vmatprep.subr.mxu0 0.0
        %322 = vmatpush1.msra.mxu0 0.0
        %323 = vmatprep.subr.mxu0 0.0
        %324 = vmatpush1.msra.mxu0 0.0
        %325 = vmatprep.subr.mxu0 0.0
        %326 = vmatpush1.msra.mxu0 0.0
        %327 = vmatprep.subr.mxu0 0.0
        %328 = vmatpush1.msra.mxu0 0.0
        %329 = vmatprep.subr.mxu0 0.0
        %330 = vmatpush1.msra.mxu0 0.0
        %331 = vmatprep.subr.mxu0 0.0
        %332 = vmatpush1.msra.mxu0 0.0
        %333 = vmatprep.subr.mxu0 0.0
        %334 = vmatpush1.msra.mxu0 0.0
        %335 = vmatprep.subr.mxu0 0.0
        %336 = vmatpush1.msra.mxu0 %v196
        %337 = vmatprep.subr.mxu0 0.0
        %338 = vmatpush2.msra.mxu0 0.0
        %339 = vmatprep.subr.mxu0 0.0
        %340 = vmatpush2.msra.mxu0 0.0
        %341 = vmatprep.subr.mxu0 0.0
        %342 = vmatpush2.msra.mxu0 0.0
        %343 = vmatprep.subr.mxu0 0.0
        %344 = vmatpush2.msra.mxu0 0.0
        %345 = vmatprep.subr.mxu0 0.0
        %346 = vmatpush2.msra.mxu0 0.0
        %347 = vmatprep.subr.mxu0 0.0
        %348 = vmatpush2.msra.mxu0 0.0
        %349 = vmatprep.subr.mxu0 0.0
        %350 = vmatpush2.msra.mxu0 0.0
        %351 = vmatprep.subr.mxu0 0.0
        %352 = vmatpush2.msra.mxu0 0.0
        %353 = vmatprep.subr.mxu0 0.0
        %354 = vmatpush2.msra.mxu0 0.0
        %355 = vmatprep.subr.mxu0 0.0
        %356 = vmatpush2.msra.mxu0 0.0
        %357 = vmatprep.subr.mxu0 0.0
        %358 = vmatpush2.msra.mxu0 0.0
        %359 = vmatprep.subr.mxu0 0.0
        %360 = vmatpush2.msra.mxu0 0.0
        %361 = vmatprep.subr.mxu0 0.0
        %362 = vmatpush2.msra.mxu0 0.0
        %363 = vmatprep.subr.mxu0 0.0
        %364 = vmatpush2.msra.mxu0 0.0
        %365 = vmatprep.subr.mxu0 0.0
        %366 = vmatpush2.msra.mxu0 0.0
        %367 = vmatprep.subr.mxu0 0.0
        %368 = vmatpush2.msra.mxu0 0.0
        %369 = vmatprep.mubr.f32.mxu0 0.0
        %370 = vmatmul.mubr.f32.gmra.mxu0 %v303
        %v371 = vpop.f32.mrf.mxu0
        %v372 = vadd.f32 0.0, %v371
        %v373 = vpop.f32.mrf.mxu0
        %374 = vdwg.mxu0
        %v375 = vld [vmem:[#allocation4] sm:$0xf]
        %377 = vset.pattern.permute.xlu0 0
        %378 = vperm.xlu0 %377, %v283
        %v379 = vpop.permute.xlu0 %378
        %v381 = vmul.f32 %v379, %v375
        %v382 = vadd.f32 %v381, %v372
        %vm383 = vcmask 257024
        %384 = vst.msk [vmem:[#allocation4] sm:$0xf] %vm383, %v382
        // Predicated region
        $region41: #{tpu_custom_call.1} parent=27 // pred_check
          %p385 = pneg %p187
        $region42: #{tpu_custom_call.1} parent=27 // pred_check_branch
          %387 = sbr.rel (%p385) target = $region44
        $region43: #{tpu_custom_call.1} parent=27 // pred_region
          %v388 = vld [vmem:[#allocation4] sm:$0xf]
          %v389 = vld [vmem:[#allocation3] sm:$0xf]
          %391 = vset.pattern.permute.xlu0 0
          %392 = vperm.xlu0 %391, %v389
          %v393 = vpop.permute.xlu0 %392
          %v395 = vrcp.pop %v393
          %v396 = vmul.f32 %v388, %v395
          %397 = vst.msk [vmem:[%s186] sm:$0xf] %vm383, %v396
        $region44: #{tpu_custom_call.1} parent=27 // pred_fallthru
          _
        %s398 = sand.u32 %s89, 1
        %s399 = scalar_lea.sflag [#allocation7], %s398
        %s400 = sand.u32 %s89, 1
        %s401 = smul.addr %s400, 4
        %s402 = scalar_lea.vmem [#allocation10], %s401
        // Predicated region
        $region45: #{tpu_custom_call.1} parent=27 // pred_check
          %p403 = pneg %p99
        $region46: #{tpu_custom_call.1} parent=27 // pred_check_branch
          %405 = sbr.rel (%p403) target = $region48
        $region47: #{tpu_custom_call.1} parent=27 // pred_region
          %s407 = ssub.s32 64, 64
          %408 = vsyncadd %s399, %s407
          %s409 = smul.addr %s24, 64
          %s410 = scalar_lea.hbm %s2, %s409
          %s412 = sshll.u32 %s402, 4
          %s413 = int_to_ptr.vmem [resolvable:$true] %s412
          %415 = dma.vmem_to_hbm [thread:$0]  %s413, 64, %s410, %s399
        $region48: #{tpu_custom_call.1} parent=27 // pred_fallthru
          _
      $region28: #{tpu_custom_call.1} parent=5 // pred_fallthru
        _
      %p416 = scmp.le.s32.totalorder 2, %s15
      // Predicated region
      $region49: #{tpu_custom_call.1} parent=5 // pred_check
        %p417 = pneg %p416
      $region50: #{tpu_custom_call.1} parent=5 // pred_check_branch
        %419 = sbr.rel (%p417) target = $region52
      $region51: #{tpu_custom_call.1} parent=5 // pred_region
        %s420 = ssub.s32 %s15, 2
        // Predicated region
        $region53: #{tpu_custom_call.1} parent=51 // pred_check
          %p421 = pneg %p105
        $region54: #{tpu_custom_call.1} parent=51 // pred_check_branch
          %423 = sbr.rel (%p421) target = $region56
        $region55: #{tpu_custom_call.1} parent=51 // pred_region
          %s424 = sand.u32 %s90, 1
          %s425 = scalar_lea.sflag [#allocation7], %s424
          %s426 = sand.u32 %s90, 1
          %s427 = smul.addr %s426, 4
          %s428 = scalar_lea.vmem [#allocation10], %s427
          %429 = dma.done %s425, 64
        $region56: #{tpu_custom_call.1} parent=51 // pred_fallthru
          _
      $region52: #{tpu_custom_call.1} parent=5 // pred_fallthru
        _
    $region6: #{tpu_custom_call.1} parent=1 // loop_footer
      %s19 = sadd.s32 1, %s15
    $region7: #{tpu_custom_call.1} parent=1 // loop_footer_branch
      %14 = sbr.rel target = $region3
    $region8: #{tpu_custom_call.1} parent=1 // loop_exit
      _
    %430 = vsyncpa [#allocation6], 1
    %s431 = scalar_lea.sflag [#allocation6], 1
    %432 = vsyncpa %s431, 1
    %433 = vsyncpa [#allocation9], 1
    %434 = vsyncpa [#allocation7], 1
    %s435 = scalar_lea.sflag [#allocation7], 1
    %436 = vsyncpa %s435, 1

</llo_original>
